<compile_context>
chip_gen: v7x
topology: tpu7x:2x2x1
jax: 0.10.0
libtpu: 0.0.40
codegen_flags: <defaults>
</compile_context>

<pallas_src>
import jax
import jax.numpy as jnp
from jax.experimental import pallas as pl
from jax.experimental.pallas import tpu as pltpu

# Deterministic "parameters" of the lambda (synthetic, in-script).
ACTION_SCALE = 2.5   # (action_max - action_min) / 2
ACTION_SHIFT = 0.5   # (action_max + action_min) / 2

LANE = 512        # lane-dense last dim (multiple of 128)
TILE_ROWS = 512   # 512 rows * 512 lanes * 4 B = 1 MiB per f32 tile


def _round_up(x: int, m: int) -> int:
    return ((x + m - 1) // m) * m


def _lambda_kernel(x_ref, o_ref):
    # Elementwise affine lambda on the VPU: out = x * scale + shift.
    # One vmul + vadd per vreg; kernel is purely HBM-streaming bound.
    o_ref[...] = x_ref[...] * ACTION_SCALE + ACTION_SHIFT


def lambda_layer(x: jax.Array) -> jax.Array:
    """Pallas implementation of LambdaLayer(lambda x: x * scale + shift).

    Accepts any shape; internally flattens to a lane-dense (rows, LANE) slab,
    tiles the row axis, and restores the original shape on return.
    """
    orig_shape = x.shape
    n = x.size

    # Rows of the lane-dense slab and the row-tile size (multiple of 8).
    rows = pl.cdiv(n, LANE)
    tb = min(TILE_ROWS, _round_up(max(rows, 1), 8))
    padded_rows = _round_up(max(rows, 1), tb)
    padded_n = padded_rows * LANE

    flat = jnp.ravel(x)
    if padded_n != n:
        flat = jnp.pad(flat, (0, padded_n - n))
    x2d = flat.reshape(padded_rows, LANE)

    out2d = pl.pallas_call(
        _lambda_kernel,
        out_shape=jax.ShapeDtypeStruct((padded_rows, LANE), x.dtype),
        grid_spec=pl.GridSpec(
            grid=(padded_rows // tb,),
            in_specs=[pl.BlockSpec((tb, LANE), lambda i: (i, 0))],
            out_specs=pl.BlockSpec((tb, LANE), lambda i: (i, 0)),
        ),
        compiler_params=pltpu.CompilerParams(
            # Each row tile is independent -> shard across TCs on v7x,
            # neutral on single-TC v5e/v6e.
            dimension_semantics=("parallel",),
        ),
    )(x2d)

    return out2d.reshape(-1)[:n].reshape(orig_shape)


if __name__ == "__main__":
    key = jax.random.PRNGKey(0)

    # Small shape consistent with the module's typical use (batch of actions).
    B, D = 2, 32
    x_small = jax.random.normal(key, (B, D), dtype=jnp.float32)
    out_small = jax.block_until_ready(lambda_layer(x_small))
    ref_small = x_small * ACTION_SCALE + ACTION_SHIFT
    assert out_small.shape == ref_small.shape and out_small.dtype == ref_small.dtype
    assert jnp.allclose(out_small, ref_small, atol=1e-6, rtol=1e-6)

    # Larger input to exercise the tiled, pipelined path (multiple grid steps).
    x_big = jax.random.normal(jax.random.PRNGKey(1), (4096, 512), dtype=jnp.float32)
    out_big = jax.block_until_ready(lambda_layer(x_big))
    ref_big = x_big * ACTION_SCALE + ACTION_SHIFT
    assert jnp.allclose(out_big, ref_big, atol=1e-6, rtol=1e-6)

    print("KERNEL_OK")
</pallas_src>

<mosaic_0001>
module attributes {stable_mosaic.version = 11 : i64} {
  func.func @_lambda_kernel(%arg0: i32, %arg1: memref<8x512xf32, #tpu.memory_space<vmem>>, %arg2: memref<8x512xf32, #tpu.memory_space<vmem>>) attributes {dimension_semantics = [#tpu.dimension_semantics<parallel>], iteration_bounds = array<i64: 1>, scalar_prefetch = 0 : i64, scratch_operands = 0 : i64, tpu.core_type = #tpu.core_type<tc>, window_params = [{transform_indices = @transform_0, window_bounds = array<i64: 8, 512>}, {transform_indices = @transform_1, window_bounds = array<i64: 8, 512>}]} {
    %c0 = arith.constant 0 : index
    %c0_0 = arith.constant 0 : index
    %0 = vector.load %arg1[%c0, %c0_0] : memref<8x512xf32, #tpu.memory_space<vmem>>, vector<8x512xf32>
    %cst = arith.constant 2.500000e+00 : f32
    %1 = vector.broadcast %cst : f32 to vector<8x512xf32>
    %2 = arith.mulf %0, %1 : vector<8x512xf32>
    %cst_1 = arith.constant 5.000000e-01 : f32
    %3 = vector.broadcast %cst_1 : f32 to vector<8x512xf32>
    %4 = arith.addf %2, %3 : vector<8x512xf32>
    %c0_2 = arith.constant 0 : index
    %c0_3 = arith.constant 0 : index
    %5 = vector.load %arg2[%c0_2, %c0_3] : memref<8x512xf32, #tpu.memory_space<vmem>>, vector<8x512xf32>
    tpu.vector_store %arg2[%c0_2, %c0_3], %4 {strides = array<i32>} : memref<8x512xf32, #tpu.memory_space<vmem>>, vector<8x512xf32>,
    return
  }
  func.func @transform_0(%arg0: i32) -> (i32, i32) {
    %c0_i32 = arith.constant 0 : i32
    %c0_i32_0 = arith.constant 0 : i32
    return %arg0, %c0_i32 : i32, i32
  }
  func.func @transform_1(%arg0: i32) -> (i32, i32) {
    %c0_i32 = arith.constant 0 : i32
    %c0_i32_0 = arith.constant 0 : i32
    return %arg0, %c0_i32 : i32, i32
  }
}

</mosaic_0001>

<llo_original>
// kernel: tpu_custom_call.1
$region0: #{tpu_custom_call.1}
  #allocation0 [shape = 'u32[]', space=smem, size = 0x4, offset = 0x4, fixed_abs, tag = 'smem constant byte address 0x4 - core index']
  #allocation1 [shape = 'u32[144,128]{1,0:T(1,128)}', space=vmem, size = 0x12000, scoped, tag = 'internal scratch']
  %s0 = inlined_call_operand.hbm [shape: f32[8,512], index: 0, kind: input, shape index: {}]
  %s1 = inlined_call_operand.hbm [shape: f32[8,512], index: 1, kind: output, shape index: {}]
  %s2 = sld [smem:[#allocation0]]
  $region18: #{tpu_custom_call.1} parent=0
    _
  %s4 = ssub.s32 1, %s2
  %s5 = scalar_select 0, %s4, %s2
  $region1: #{tpu_custom_call.1} parent=0
    #allocation2 [shape = 'u8[16384]{0}', space=vmem, size = 0x4000, scoped, tag = 'input window, operand 0, single buffered']
    #allocation3 [shape = 's32[1]{0}', space=sflag, size = 0x4, scoped, tag = 'scoped memory for tpu_custom_call.1']
    #allocation4 [shape = 's32[1]{0}', space=sflag, size = 0x4, scoped, tag = 'scoped memory for tpu_custom_call.1']
    #allocation5 [shape = 'u8[16384]{0}', space=vmem, size = 0x4000, scoped, tag = 'output window, operand 0, single buffered']
    %6 = vsyncpa [#allocation3], 0
    %7 = vsyncpa [#allocation4], 0
    // Predicated region
    $region2: #{tpu_custom_call.1} parent=1 // pred_check
      _
    $region3: #{tpu_custom_call.1} parent=1 // pred_check_branch
      %9 = sbr.rel (0) target = $region5
    $region4: #{tpu_custom_call.1} parent=1 // pred_region
      %s11 = ssub.s32 512, 512
      %12 = vsyncadd [#allocation3], %s11
      %s14 = sshll.u32 [#allocation2], 4
      %s15 = int_to_ptr.vmem [resolvable:$true] %s14
      %17 = dma.hbm_to_vmem [thread:$0]  %s0, 512, %s15, [#allocation3]
    $region5: #{tpu_custom_call.1} parent=1 // pred_fallthru
      _
    // Predicated region
    $region6: #{tpu_custom_call.1} parent=1 // pred_check
      _
    $region7: #{tpu_custom_call.1} parent=1 // pred_check_branch
      %19 = sbr.rel (0) target = $region9
    $region8: #{tpu_custom_call.1} parent=1 // pred_region
      %20 = dma.done [#allocation3], 512
    $region9: #{tpu_custom_call.1} parent=1 // pred_fallthru
      _
    %v21 = vld [vmem:[#allocation2] sm:$0xff]
    %v22 = vld [vmem:[#allocation2 + $0x8] sm:$0xff]
    %v23 = vld [vmem:[#allocation2 + $0x10] sm:$0xff]
    %v24 = vld [vmem:[#allocation2 + $0x18] sm:$0xff]
    %v25 = vmul.f32 %v21, 2.5
    %v26 = vmul.f32 %v22, 2.5
    %v27 = vmul.f32 %v23, 2.5
    %v28 = vmul.f32 %v24, 2.5
    %v29 = vadd.f32 %v25, 0.5
    %v30 = vadd.f32 %v26, 0.5
    %v31 = vadd.f32 %v27, 0.5
    %v32 = vadd.f32 %v28, 0.5
    %33 = vst [vmem:[#allocation5] sm:$0xff] %v29
    %34 = vst [vmem:[#allocation5 + $0x8] sm:$0xff] %v30
    %35 = vst [vmem:[#allocation5 + $0x10] sm:$0xff] %v31
    %36 = vst [vmem:[#allocation5 + $0x18] sm:$0xff] %v32
    // Predicated region
    $region10: #{tpu_custom_call.1} parent=1 // pred_check
      _
    $region11: #{tpu_custom_call.1} parent=1 // pred_check_branch
      %38 = sbr.rel (0) target = $region13
    $region12: #{tpu_custom_call.1} parent=1 // pred_region
      %s40 = ssub.s32 512, 512
      %41 = vsyncadd [#allocation4], %s40
      %s43 = sshll.u32 [#allocation5], 4
      %s44 = int_to_ptr.vmem [resolvable:$true] %s43
      %46 = dma.vmem_to_hbm [thread:$0]  %s44, 512, %s1, [#allocation4]
    $region13: #{tpu_custom_call.1} parent=1 // pred_fallthru
      _
    // Predicated region
    $region14: #{tpu_custom_call.1} parent=1 // pred_check
      _
    $region15: #{tpu_custom_call.1} parent=1 // pred_check_branch
      %48 = sbr.rel (0) target = $region17
    $region16: #{tpu_custom_call.1} parent=1 // pred_region
      %49 = dma.done [#allocation4], 512
    $region17: #{tpu_custom_call.1} parent=1 // pred_fallthru
      _
    %50 = vsyncpa [#allocation3], 1
    %51 = vsyncpa [#allocation4], 1

</llo_original>
